<compile_context>
chip_gen: v5e
topology: v5e:2x2
jax: 0.10.0
libtpu: 0.0.40
codegen_flags: <defaults>
</compile_context>

<pallas_src>
import functools
import math

import jax
import jax.numpy as jnp
from jax import lax
from jax.experimental import pallas as pl
from jax.experimental.pallas import tpu as pltpu


def build_pe_table(d_model: int, max_len: int) -> jnp.ndarray:
    """Sinusoidal positional-encoding table, shape (max_len, d_model), float32."""
    position = jnp.arange(0, max_len, dtype=jnp.float32)[:, None]            # (L, 1)
    div_term = jnp.exp(
        jnp.arange(0, d_model, 2, dtype=jnp.float32) * (-math.log(10000.0) / d_model)
    )                                                                         # (D/2,)
    pe = jnp.zeros((max_len, d_model), dtype=jnp.float32)
    pe = pe.at[:, 0::2].set(jnp.sin(position * div_term))
    pe = pe.at[:, 1::2].set(jnp.cos(position * div_term))
    return pe


def _hash_keep_bits(idx, seed):
    """Cheap 2-round xorshift-multiply hash of a global element index (int32).

    ~7 int VPU ops/element (vs ~12 for full fmix32) -- ample avalanche for a
    Bernoulli threshold mask, and identical regardless of tiling / grid shape.
    """
    h = idx * jnp.int32(-1640531527) + seed                 # 0x9E3779B9 golden-ratio mix
    h = h ^ lax.shift_right_logical(h, jnp.int32(16))
    h = h * jnp.int32(-2048144789)                          # 0x85EBCA6B
    h = h ^ lax.shift_right_logical(h, jnp.int32(15))
    return h


def _dropout_scale(y, idx, seed, p):
    thresh = jnp.int32(min(int(p * 2147483648.0), 2147483647))
    bits = _hash_keep_bits(idx, seed)
    keep = (bits & jnp.int32(0x7FFFFFFF)) >= thresh
    # Fold the 1/(1-p) scale into the select (scale-or-zero, then one multiply).
    return y * jnp.where(keep, jnp.float32(1.0 / (1.0 - p)), jnp.float32(0.0))


def _pos_enc_flat_kernel(seed_ref, x_ref, pe_ref, o_ref, *, p, apply_dropout, batch):
    """Lane-flattened path: x_ref/o_ref are (tS, B*D), pe_ref is (tS, D) f32."""
    pe = pe_ref[...]
    if batch > 1:
        pe = jnp.concatenate([pe] * batch, axis=1)          # lane-tile -> (tS, B*D); pe << x
    y = x_ref[...].astype(jnp.float32) + pe

    if apply_dropout:
        rows, cols = x_ref.shape
        # Global linear element index = pid*block_elems + r*cols + c (2 iotas only).
        base = pl.program_id(0) * jnp.int32(rows * cols)
        ri = lax.broadcasted_iota(jnp.int32, (rows, cols), 0)
        ci = lax.broadcasted_iota(jnp.int32, (rows, cols), 1)
        idx = base + ri * jnp.int32(cols) + ci
        y = _dropout_scale(y, idx, seed_ref[0], p)

    o_ref[...] = y.astype(o_ref.dtype)


def _pos_enc_tiled_kernel(seed_ref, x_ref, pe_ref, o_ref, *, p, apply_dropout,
                          full_b, full_d):
    """3-D path: x_ref/o_ref are (tS, tB, D), pe_ref is (tS, D) f32."""
    y = x_ref[...].astype(jnp.float32) + pe_ref[...][:, None, :]

    if apply_dropout:
        t_s, t_b, d = x_ref.shape
        s0 = pl.program_id(0) * t_s
        b0 = pl.program_id(1) * t_b
        # Scalar base hoisted out of the vector index math.
        base = (s0 * jnp.int32(full_b) + b0) * jnp.int32(full_d)
        row_stride = jnp.int32(full_b) * jnp.int32(full_d)   # folded constant
        si = lax.broadcasted_iota(jnp.int32, (t_s, t_b, d), 0)
        bi = lax.broadcasted_iota(jnp.int32, (t_s, t_b, d), 1)
        di = lax.broadcasted_iota(jnp.int32, (t_s, t_b, d), 2)
        idx = base + si * row_stride + bi * jnp.int32(full_d) + di
        y = _dropout_scale(y, idx, seed_ref[0], p)

    o_ref[...] = y.astype(o_ref.dtype)


# ---------------------------------------------------------------------------
# Tiling / wrapper
# ---------------------------------------------------------------------------

_TARGET_BLOCK_BYTES = 2 << 20   # ~2 MiB x-blocks: >=85-90% of HBM roofline, fits all gens.


def _vmem_capacity_bytes() -> int:
    """Generation-aware VMEM capacity with a conservative (v7x per-TC) fallback."""
    try:
        cap = int(getattr(pltpu.get_tpu_info(), "vmem_capacity_bytes", 0))
        if cap > 0:
            return cap
    except Exception:
        pass
    return 64 * 1024 * 1024


def _seq_tile(s, row_bytes, target_bytes):
    """Rows per block: ~target_bytes, multiple of 8 (or full s); keep >=2 tiles when big."""
    t_s = max(1, target_bytes // max(1, row_bytes))
    if t_s >= s:
        t_s = s
    else:
        t_s = min(max(8, (t_s // 8) * 8), s)
    # Don't collapse to a single grid step for large arrays: leave >=2 seq tiles so
    # dimension_semantics=("parallel",...) can shard across v7x's two TensorCores.
    if t_s == s and s >= 16 and s * row_bytes >= (1 << 20):
        half = (((s + 1) // 2) + 7) // 8 * 8
        if half < s:
            t_s = half
    return int(t_s)


def _batch_tile(b, d, itemsize, pack, target_bytes):
    """Batch tile: full batch if a row fits; else largest multiple of the sublane pack
    that fits the budget (ragged last tile is fine -- Pallas masks it)."""
    if b * d * itemsize <= target_bytes:
        return int(b)
    t_b = (target_bytes // (d * itemsize)) // pack * pack
    return int(max(pack, min(t_b, b)))


def positional_encoding_forward(x, pe_table, *, seed=0, p=0.1, training=True,
                                donate_x=False):
    """x: (S, B, D). Returns dropout(x + pe[:S]) with PyTorch-module semantics."""
    s, b, d = x.shape
    if not (0.0 <= float(p) < 1.0):
        raise ValueError("dropout p must be in [0, 1)")
    apply_dropout = bool(training) and float(p) > 0.0

    # torch adds an f32 `pe` buffer -> result promotes to float32 for low-precision x.
    out_dtype = jnp.promote_types(x.dtype, jnp.float32)

    pe_slice = pe_table[:s, :].astype(jnp.float32)               # (S, D)
    seed_arr = jnp.asarray([seed], dtype=jnp.int32)

    in_item = jnp.dtype(x.dtype).itemsize
    out_item = jnp.dtype(out_dtype).itemsize
    big_item = max(in_item, out_item)
    pack = 8 * max(1, 4 // in_item)                              # sublane pack: 8 f32 / 16 bf16

    capacity = _vmem_capacity_bytes()
    target = max(256 * 1024, min(_TARGET_BLOCK_BYTES, capacity // 16))

    if b < pack:
        # --- small-batch path: lane-flatten B into D (dense vregs, unmasked stores) ---
        bd = b * d
        call_x = x.reshape(s, bd)                                # contiguous, free
        t_s = _seq_tile(s, bd * big_item, target)
        grid = (pl.cdiv(s, t_s),)
        kernel = functools.partial(_pos_enc_flat_kernel, p=float(p),
                                   apply_dropout=apply_dropout, batch=b)
        in_specs = [
            pl.BlockSpec(memory_space=pltpu.MemorySpace.SMEM),           # seed scalar
            pl.BlockSpec((t_s, bd), lambda i: (i, 0)),                   # x tile
            pl.BlockSpec((t_s, d), lambda i: (i, 0)),                    # pe tile
        ]
        out_specs = pl.BlockSpec((t_s, bd), lambda i: (i, 0))
        out_shape = jax.ShapeDtypeStruct((s, bd), out_dtype)
        block_elems = t_s * bd
        pe_block_bytes = t_s * d * 4
        dims = ("parallel",)
        reshape_back = True
    else:
        # --- general path: (tS, tB, D) blocks, pe resident across the batch axis ---
        call_x = x
        t_b = _batch_tile(b, d, big_item, pack, target)
        t_s = _seq_tile(s, t_b * d * big_item, target)
        grid = (pl.cdiv(s, t_s), pl.cdiv(b, t_b))
        kernel = functools.partial(_pos_enc_tiled_kernel, p=float(p),
                                   apply_dropout=apply_dropout, full_b=b, full_d=d)
        in_specs = [
            pl.BlockSpec(memory_space=pltpu.MemorySpace.SMEM),
            pl.BlockSpec((t_s, t_b, d), lambda i, j: (i, j, 0)),
            pl.BlockSpec((t_s, d), lambda i, j: (i, 0)),                 # ignores batch axis
        ]
        out_specs = pl.BlockSpec((t_s, t_b, d), lambda i, j: (i, j, 0))
        out_shape = jax.ShapeDtypeStruct((s, b, d), out_dtype)
        block_elems = t_s * t_b * d
        pe_block_bytes = t_s * d * 4
        dims = ("parallel", "parallel")
        reshape_back = False

    # VMEM limit from the actual footprint: double-buffered x/out + pe + elementwise
    # temporaries (f32 sum + i32 index/bits) + slack, capped by generation capacity.
    x_blk = block_elems * in_item
    o_blk = block_elems * out_item
    temps = (4 if apply_dropout else 1) * block_elems * 4
    vmem_need = 2 * (x_blk + o_blk) + 2 * pe_block_bytes + temps + (4 << 20)
    vmem_limit = int(min(max(vmem_need, 16 << 20), max(32 << 20, capacity * 3 // 4)))

    io_aliases = {1: 0} if (donate_x and x.dtype == out_dtype) else {}

    out = pl.pallas_call(
        kernel,
        out_shape=out_shape,
        grid=grid,
        in_specs=in_specs,
        out_specs=out_specs,
        input_output_aliases=io_aliases,
        compiler_params=pltpu.CompilerParams(
            dimension_semantics=dims,
            vmem_limit_bytes=vmem_limit,
        ),
    )(seed_arr, call_x, pe_slice)

    if reshape_back:
        out = out.reshape(s, b, d)
    return out


if __name__ == "__main__":
    # Small shapes consistent with the module's forward: (seq, batch, d_model).
    S, B, D = 8, 2, 128
    MAX_LEN = 16
    P = 0.1

    key = jax.random.PRNGKey(0)
    pe_table = build_pe_table(d_model=D, max_len=MAX_LEN)

    # ---- small-batch (lane-flattened) path: B = 2 < sublane pack ----
    x = jax.random.normal(key, (S, B, D), dtype=jnp.float32)
    ref = x + pe_table[:S][:, None, :]

    out_eval = jax.block_until_ready(
        positional_encoding_forward(x, pe_table, seed=0, p=P, training=False)
    )
    assert out_eval.shape == (S, B, D) and out_eval.dtype == jnp.float32
    assert jnp.allclose(out_eval, ref, atol=1e-6), "eval-mode mismatch (flat path)"

    out_train = jax.block_until_ready(
        positional_encoding_forward(x, pe_table, seed=123, p=P, training=True)
    )
    dropped = out_train == 0.0
    frac = float(jnp.mean(dropped.astype(jnp.float32)))
    assert 0.01 < frac < 0.35, f"dropout fraction {frac} implausible for p={P}"
    scaled_ref = ref / (1.0 - P)
    assert bool(jnp.all(jnp.where(~dropped, jnp.abs(out_train - scaled_ref) < 1e-4, True))), \
        "kept values not scaled correctly (flat path)"

    # ---- batched (3-D tiled) path: B = 8 >= sublane pack ----
    x8 = jax.random.normal(jax.random.PRNGKey(1), (S, 8, D), dtype=jnp.float32)
    ref8 = x8 + pe_table[:S][:, None, :]
    out8 = jax.block_until_ready(
        positional_encoding_forward(x8, pe_table, seed=0, p=P, training=False)
    )
    assert jnp.allclose(out8, ref8, atol=1e-6), "eval-mode mismatch (tiled path)"
    out8t = jax.block_until_ready(
        positional_encoding_forward(x8, pe_table, seed=7, p=P, training=True)
    )
    assert 0 < int(jnp.sum(out8t == 0.0)) < out8t.size, "degenerate dropout mask (tiled path)"

    print("KERNEL_OK")
</pallas_src>

<mosaic_0001>
module attributes {stable_mosaic.version = 11 : i64} {
  func.func @_pos_enc_flat_kernel(%arg0: i32, %arg1: memref<1xi32, #tpu.memory_space<smem>>, %arg2: memref<8x256xf32, #tpu.memory_space<vmem>>, %arg3: memref<8x128xf32, #tpu.memory_space<vmem>>, %arg4: memref<8x256xf32, #tpu.memory_space<vmem>>) attributes {dimension_semantics = [#tpu.dimension_semantics<parallel>], iteration_bounds = array<i64: 1>, scalar_prefetch = 0 : i64, scratch_operands = 0 : i64, tpu.core_type = #tpu.core_type<tc>, window_params = [{transform_indices = @transform_0, window_bounds = array<i64: 1>}, {transform_indices = @transform_1, window_bounds = array<i64: 8, 256>}, {transform_indices = @transform_2, window_bounds = array<i64: 8, 128>}, {transform_indices = @transform_3, window_bounds = array<i64: 8, 256>}]} {
    %c0 = arith.constant 0 : index
    %c0_0 = arith.constant 0 : index
    %0 = vector.load %arg3[%c0, %c0_0] : memref<8x128xf32, #tpu.memory_space<vmem>>, vector<8x128xf32>
    %1 = tpu.concatenate %0, %0 in 1 : vector<8x128xf32>, vector<8x128xf32> -> vector<8x256xf32>
    %c0_1 = arith.constant 0 : index
    %c0_2 = arith.constant 0 : index
    %2 = vector.load %arg2[%c0_1, %c0_2] : memref<8x256xf32, #tpu.memory_space<vmem>>, vector<8x256xf32>
    %3 = arith.addf %2, %1 : vector<8x256xf32>
    %c0_3 = arith.constant 0 : index
    %c0_4 = arith.constant 0 : index
    %4 = vector.load %arg4[%c0_3, %c0_4] : memref<8x256xf32, #tpu.memory_space<vmem>>, vector<8x256xf32>
    tpu.vector_store %arg4[%c0_3, %c0_4], %3 {strides = array<i32>} : memref<8x256xf32, #tpu.memory_space<vmem>>, vector<8x256xf32>,
    return
  }
  func.func @transform_0(%arg0: i32) -> i32 {
    %c0_i32 = arith.constant 0 : i32
    %c0_i32_0 = arith.constant 0 : i32
    return %c0_i32 : i32
  }
  func.func @transform_1(%arg0: i32) -> (i32, i32) {
    %c0_i32 = arith.constant 0 : i32
    %c0_i32_0 = arith.constant 0 : i32
    return %arg0, %c0_i32 : i32, i32
  }
  func.func @transform_2(%arg0: i32) -> (i32, i32) {
    %c0_i32 = arith.constant 0 : i32
    %c0_i32_0 = arith.constant 0 : i32
    return %arg0, %c0_i32 : i32, i32
  }
  func.func @transform_3(%arg0: i32) -> (i32, i32) {
    %c0_i32 = arith.constant 0 : i32
    %c0_i32_0 = arith.constant 0 : i32
    return %arg0, %c0_i32 : i32, i32
  }
}

</mosaic_0001>

<llo_original>
// kernel: tpu_custom_call.1
$region0: #{tpu_custom_call.1}
  #allocation0 [shape = 'u32[]', space=smem, size = 0x4, offset = 0x4, fixed_abs, tag = 'smem constant byte address 0x4 - core index']
  #allocation1 [shape = 'u32[72,128]{1,0:T(1,128)}', space=vmem, size = 0x9000, scoped, tag = 'internal scratch']
  #allocation2 [shape = 's32[1]{0:T(128)S(6)}', space=smem, size = 0x200, scoped, tag = 'scoped memory for tpu_custom_call.1']
  %s0 = inlined_call_operand.<no memory space> [shape: s32[1], index: 0, kind: input, shape index: {}]
  %s1 = inlined_call_operand.hbm [shape: f32[8,256], index: 1, kind: input, shape index: {}]
  %s2 = inlined_call_operand.hbm [shape: f32[8,128], index: 2, kind: input, shape index: {}]
  %s3 = inlined_call_operand.hbm [shape: f32[8,256], index: 3, kind: output, shape index: {}]
  %s4 = sld [smem:[#allocation0]]
  $region30: #{tpu_custom_call.1} parent=0
    _
  %s6 = ssub.s32 1, %s4
  %s7 = scalar_select 0, %s6, %s4
  %8 = sst [smem:[#allocation2]] %s0
  $region1: #{tpu_custom_call.1} parent=0
    #allocation3 [shape = 'u8[8192]{0}', space=vmem, size = 0x2000, scoped, tag = 'input window, operand 1, single buffered']
    #allocation4 [shape = 's32[1]{0}', space=sflag, size = 0x4, scoped, tag = 'scoped memory for tpu_custom_call.1']
    #allocation5 [shape = 's32[1]{0}', space=sflag, size = 0x4, scoped, tag = 'scoped memory for tpu_custom_call.1']
    #allocation6 [shape = 'u8[4096]{0}', space=vmem, size = 0x1000, scoped, tag = 'input window, operand 2, single buffered']
    #allocation7 [shape = 's32[1]{0}', space=sflag, size = 0x4, scoped, tag = 'scoped memory for tpu_custom_call.1']
    #allocation8 [shape = 'u8[8192]{0}', space=vmem, size = 0x2000, scoped, tag = 'output window, operand 0, single buffered']
    %9 = vsyncpa [#allocation4], 0
    %10 = vsyncpa [#allocation7], 0
    %11 = vsyncpa [#allocation5], 0
    // Predicated region
    $region2: #{tpu_custom_call.1} parent=1 // pred_check
      _
    $region3: #{tpu_custom_call.1} parent=1 // pred_check_branch
      %13 = sbr.rel (0) target = $region5
    $region4: #{tpu_custom_call.1} parent=1 // pred_region
      _
    $region5: #{tpu_custom_call.1} parent=1 // pred_fallthru
      _
    // Predicated region
    $region6: #{tpu_custom_call.1} parent=1 // pred_check
      _
    $region7: #{tpu_custom_call.1} parent=1 // pred_check_branch
      %15 = sbr.rel (0) target = $region9
    $region8: #{tpu_custom_call.1} parent=1 // pred_region
      %17 = vsyncadd [#allocation4], 0
      %s19 = sshll.u32 %s1, 4
      %s20 = int_to_ptr.hbm [resolvable:$true] %s19
      %s21 = sshll.u32 [#allocation3], 4
      %s22 = int_to_ptr.vmem [resolvable:$true] %s21
      %24 = dma.hbm_to_vmem [thread:$0]  %s20, 256, %s22, [#allocation4]
    $region9: #{tpu_custom_call.1} parent=1 // pred_fallthru
      _
    // Predicated region
    $region10: #{tpu_custom_call.1} parent=1 // pred_check
      _
    $region11: #{tpu_custom_call.1} parent=1 // pred_check_branch
      %26 = sbr.rel (0) target = $region13
    $region12: #{tpu_custom_call.1} parent=1 // pred_region
      %28 = vsyncadd [#allocation7], 0
      %s30 = sshll.u32 %s2, 4
      %s31 = int_to_ptr.hbm [resolvable:$true] %s30
      %s32 = sshll.u32 [#allocation6], 4
      %s33 = int_to_ptr.vmem [resolvable:$true] %s32
      %35 = dma.hbm_to_vmem [thread:$0]  %s31, 128, %s33, [#allocation7]
    $region13: #{tpu_custom_call.1} parent=1 // pred_fallthru
      _
    // Predicated region
    $region14: #{tpu_custom_call.1} parent=1 // pred_check
      _
    $region15: #{tpu_custom_call.1} parent=1 // pred_check_branch
      %37 = sbr.rel (0) target = $region17
    $region16: #{tpu_custom_call.1} parent=1 // pred_region
      %39 = dma.done [#allocation4], 256
    $region17: #{tpu_custom_call.1} parent=1 // pred_fallthru
      _
    // Predicated region
    $region18: #{tpu_custom_call.1} parent=1 // pred_check
      _
    $region19: #{tpu_custom_call.1} parent=1 // pred_check_branch
      %41 = sbr.rel (0) target = $region21
    $region20: #{tpu_custom_call.1} parent=1 // pred_region
      %43 = dma.done [#allocation7], 128
    $region21: #{tpu_custom_call.1} parent=1 // pred_fallthru
      _
    %v44 = vld [vmem:[#allocation6] sm:$0xff]
    %v45 = vld [vmem:[#allocation3] sm:$0xff]
    %v46 = vld [vmem:[#allocation3 + $0x8] sm:$0xff]
    %v47 = vadd.f32 %v45, %v44
    %v48 = vadd.f32 %v46, %v44
    %49 = vst [vmem:[#allocation8] sm:$0xff] %v47
    %50 = vst [vmem:[#allocation8 + $0x8] sm:$0xff] %v48
    // Predicated region
    $region22: #{tpu_custom_call.1} parent=1 // pred_check
      _
    $region23: #{tpu_custom_call.1} parent=1 // pred_check_branch
      %52 = sbr.rel (0) target = $region25
    $region24: #{tpu_custom_call.1} parent=1 // pred_region
      %54 = vsyncadd [#allocation5], 0
      %s56 = sshll.u32 [#allocation8], 4
      %s57 = int_to_ptr.vmem [resolvable:$true] %s56
      %s58 = sshll.u32 %s3, 4
      %s59 = int_to_ptr.hbm [resolvable:$true] %s58
      %61 = dma.vmem_to_hbm [thread:$0]  %s57, 256, %s59, [#allocation5]
    $region25: #{tpu_custom_call.1} parent=1 // pred_fallthru
      _
    // Predicated region
    $region26: #{tpu_custom_call.1} parent=1 // pred_check
      _
    $region27: #{tpu_custom_call.1} parent=1 // pred_check_branch
      %63 = sbr.rel (0) target = $region29
    $region28: #{tpu_custom_call.1} parent=1 // pred_region
      %65 = dma.done [#allocation5], 256
    $region29: #{tpu_custom_call.1} parent=1 // pred_fallthru
      _
    %66 = vsyncpa [#allocation4], 1
    %67 = vsyncpa [#allocation7], 1
    %68 = vsyncpa [#allocation5], 1

</llo_original>
